<compile_context>
chip_gen: v5e
topology: v5e:2x2
jax: 0.10.0
libtpu: 0.0.40
codegen_flags: <defaults>
</compile_context>

<pallas_src>
from functools import partial
import math

import jax
import jax.numpy as jnp
from jax.experimental import pallas as pl
from jax.experimental.pallas import tpu as pltpu


def _drop_path_kernel(mask_ref, x_ref, o_ref, *, inv_keep_prob):
    # mask_ref: SMEM scalar-prefetch (B,) int32; 1 = keep sample, 0 = drop.
    # x_ref/o_ref: VMEM tiles (1, TR, L) of the current batch sample.
    b = pl.program_id(0)
    scale = mask_ref[b].astype(jnp.float32) * jnp.float32(inv_keep_prob)
    # Multiply in the output dtype (avoids f32 up/down casts for bf16 inputs).
    o_ref[...] = x_ref[...] * scale.astype(o_ref.dtype)


def drop_path(x, drop_prob, training, *, key=None, seed=0):
    """Pallas DropPath. x: (B, ...). Returns array of same shape/dtype."""
    if drop_prob is None or drop_prob == 0.0 or not training:
        return x  # identity fast path (eval mode / p == 0)
    if drop_prob >= 1.0:
        return jnp.zeros_like(x)  # keep_prob == 0 guard (avoid div-by-zero)

    keep_prob = 1.0 - float(drop_prob)
    if key is None:
        key = jax.random.PRNGKey(seed)

    B = x.shape[0]
    S = math.prod(x.shape[1:])

    # Per-sample keep decision (prob keep_prob), exactly mirroring
    # floor(keep_prob + U[0,1)) of the reference implementation.
    keep_mask = jax.random.bernoulli(key, p=keep_prob, shape=(B,)).astype(jnp.int32)

    # Lane-dense layout: collapse non-batch dims to a (rows, 128) slab when
    # possible; otherwise fall back to one full-sample block.
    LANE = 128
    if S % LANE == 0:
        R = S // LANE
        xr = x.reshape(B, R, LANE)
    else:
        R = 1
        xr = x.reshape(B, 1, S)
    L = xr.shape[-1]

    # Row-tile so one block is ~1 MiB: big enough to hit HBM roofline, small
    # enough that double-buffered in+out fits the default scoped VMEM limit on
    # every generation (incl. v7x's 64 MiB physical VMEM).
    bytes_per_row = L * xr.dtype.itemsize
    target_rows = max(8, (1 << 20) // max(bytes_per_row, 1))
    TR = R if R <= target_rows else (target_rows // 8) * 8
    grid = (B, pl.cdiv(R, TR))

    kernel = partial(_drop_path_kernel, inv_keep_prob=1.0 / keep_prob)

    out = pl.pallas_call(
        kernel,
        out_shape=jax.ShapeDtypeStruct(xr.shape, xr.dtype),
        grid_spec=pltpu.PrefetchScalarGridSpec(
            num_scalar_prefetch=1,
            grid=grid,
            in_specs=[pl.BlockSpec((1, TR, L), lambda b, r, mask: (b, r, 0))],
            out_specs=pl.BlockSpec((1, TR, L), lambda b, r, mask: (b, r, 0)),
        ),
        compiler_params=pltpu.CompilerParams(
            # No carried state: every block is independent -> fully parallel
            # (lets v7x shard the batch/row grid across its 2 TensorCores).
            dimension_semantics=("parallel", "parallel"),
        ),
    )(keep_mask, xr)

    return out.reshape(x.shape)


class DropPath:
    """Mirror of the PyTorch nn.Module (no parameters)."""

    def __init__(self, drop_prob=None):
        self.drop_prob = drop_prob
        self.training = True

    def __call__(self, x, seed=0, key=None):
        return drop_path(x, self.drop_prob, self.training, key=key, seed=seed)


if __name__ == "__main__":
    key = jax.random.PRNGKey(0)
    B, N, D = 2, 8, 32
    x = jax.random.normal(key, (B, N, D), dtype=jnp.float32)

    module = DropPath(drop_prob=0.5)

    # Training mode: stochastic per-sample drop (mask from jax.random, scale
    # applied inside the Pallas kernel).
    y_train = jax.block_until_ready(module(x, seed=1234))

    # Each sample must be exactly 0 or x / keep_prob (binary per-sample mask).
    keep_prob = 1.0 - module.drop_prob
    for b in range(B):
        ok_keep = jnp.allclose(y_train[b], x[b] / keep_prob, atol=1e-5)
        ok_drop = jnp.allclose(y_train[b], 0.0, atol=1e-7)
        assert bool(ok_keep) or bool(ok_drop), f"sample {b}: not a valid drop-path output"

    # Eval mode: identity.
    module.training = False
    y_eval = jax.block_until_ready(module(x))
    assert jnp.allclose(y_eval, x)

    print("KERNEL_OK")
</pallas_src>

<mosaic_0001>
module attributes {stable_mosaic.version = 11 : i64} {
  func.func @_drop_path_kernel(%arg0: i32, %arg1: i32, %arg2: memref<2xi32, #tpu.memory_space<smem>>, %arg3: memref<1x2x128xf32, #tpu.memory_space<vmem>>, %arg4: memref<1x2x128xf32, #tpu.memory_space<vmem>>) attributes {dimension_semantics = [#tpu.dimension_semantics<parallel>, #tpu.dimension_semantics<parallel>], iteration_bounds = array<i64: 2, 1>, scalar_prefetch = 1 : i64, scratch_operands = 0 : i64, tpu.core_type = #tpu.core_type<tc>, window_params = [{transform_indices = @transform_0, window_bounds = array<i64: 1, 2, 128>}, {transform_indices = @transform_1, window_bounds = array<i64: 1, 2, 128>}]} {
    %0 = arith.index_cast %arg0 : i32 to index
    %1 = memref.load %arg2[%0] : memref<2xi32, #tpu.memory_space<smem>>
    %2 = arith.sitofp %1 : i32 to f32
    %cst = arith.constant 2.000000e+00 : f32
    %3 = arith.mulf %2, %cst : f32
    %c0 = arith.constant 0 : index
    %c0_0 = arith.constant 0 : index
    %c0_1 = arith.constant 0 : index
    %4 = vector.load %arg3[%c0, %c0_0, %c0_1] : memref<1x2x128xf32, #tpu.memory_space<vmem>>, vector<1x2x128xf32>
    %5 = vector.broadcast %3 : f32 to vector<1x2x128xf32>
    %6 = arith.mulf %4, %5 : vector<1x2x128xf32>
    %c0_2 = arith.constant 0 : index
    %c0_3 = arith.constant 0 : index
    %c0_4 = arith.constant 0 : index
    %7 = vector.load %arg4[%c0_2, %c0_3, %c0_4] : memref<1x2x128xf32, #tpu.memory_space<vmem>>, vector<1x2x128xf32>
    tpu.vector_store %arg4[%c0_2, %c0_3, %c0_4], %6 {strides = array<i32>} : memref<1x2x128xf32, #tpu.memory_space<vmem>>, vector<1x2x128xf32>,
    return
  }
  func.func @transform_0(%arg0: i32, %arg1: i32, %arg2: memref<2xi32, #tpu.memory_space<smem>>) -> (i32, i32, i32) {
    %c0_i32 = arith.constant 0 : i32
    %c0_i32_0 = arith.constant 0 : i32
    return %arg0, %arg1, %c0_i32 : i32, i32, i32
  }
  func.func @transform_1(%arg0: i32, %arg1: i32, %arg2: memref<2xi32, #tpu.memory_space<smem>>) -> (i32, i32, i32) {
    %c0_i32 = arith.constant 0 : i32
    %c0_i32_0 = arith.constant 0 : i32
    return %arg0, %arg1, %c0_i32 : i32, i32, i32
  }
}

</mosaic_0001>

<llo_original>
// kernel: tpu_custom_call.1
$region0: #{tpu_custom_call.1}
  #allocation0 [shape = 'u32[]', space=smem, size = 0x4, offset = 0x4, fixed_abs, tag = 'smem constant byte address 0x4 - core index']
  #allocation1 [shape = 'u32[72,128]{1,0:T(1,128)}', space=vmem, size = 0x9000, scoped, tag = 'internal scratch']
  #allocation2 [shape = 's32[1]{0}', space=sflag, size = 0x4, scoped, tag = 'scoped memory for tpu_custom_call.1']
  #allocation3 [shape = 'u8[512]{0}', space=smem, size = 0x200, scoped, tag = 'prefetched SMEM operand 0']
  %s0 = inlined_call_operand.hbm [shape: s32[2], index: 0, kind: input, shape index: {}]
  %s1 = inlined_call_operand.hbm [shape: f32[2,2,128], index: 1, kind: input, shape index: {}]
  %s2 = inlined_call_operand.hbm [shape: f32[2,2,128], index: 2, kind: output, shape index: {}]
  %s3 = sld [smem:[#allocation0]]
  $region41: #{tpu_custom_call.1} parent=0
    _
  %s5 = ssub.s32 1, %s3
  %s6 = scalar_select 0, %s5, %s3
  %s8 = sshll.u32 %s0, 4
  %s9 = int_to_ptr.hbm [resolvable:$true] %s8
  %11 = dma.hbm_to_smem %s9, 16, [#allocation3], [#allocation2]
  %13 = dma.done [#allocation2], 16
  %14 = sfence
  $region1: #{tpu_custom_call.1} parent=0
    #allocation4 [shape = 'u8[2048]{0}', space=vmem, size = 0x800, scoped, tag = 'input window, operand 1']
    #allocation5 [shape = 's32[2]{0}', space=sflag, size = 0x8, scoped, tag = 'scoped memory for tpu_custom_call.1']
    #allocation6 [shape = 's32[2]{0}', space=sflag, size = 0x8, scoped, tag = 'scoped memory for tpu_custom_call.1']
    #allocation7 [shape = 'u8[2048]{0}', space=vmem, size = 0x800, scoped, tag = 'output window, operand 0']
    %15 = vsyncpa [#allocation5], 0
    %s16 = scalar_lea.sflag [#allocation5], 1
    %17 = vsyncpa %s16, 0
    %18 = vsyncpa [#allocation6], 0
    %s19 = scalar_lea.sflag [#allocation6], 1
    %20 = vsyncpa %s19, 0
    loop: start=0, step=1, limit=4
    $region2: #{tpu_custom_call.1} parent=1 // loop_pre_header
      _
    $region3: #{tpu_custom_call.1} parent=1 // loop_header
      %s22 = sphi 0, %s26
      %p23 = scmp.ge.s32.totalorder %s22, 4
      %s29 = sphi 0, %s41
      %s30 = sphi 0, %s37
      %s31 = sphi 0, %s29
      %s32 = sphi 0, %s30
      %s33 = sphi 0, %s31
      %s34 = sphi 0, %s32
      %s46 = sphi 0, %s48
      %s49 = sphi 0, %s46
      %s50 = sphi 0, %s49
      %s66 = sphi 0, %s50
      %s74 = sphi 0, %s76
      %s77 = sphi 0, %s74
      %s78 = sphi 0, %s77
      %s94 = sphi 0, %s78
    $region4: #{tpu_custom_call.1} parent=1 // loop_header_branch
      %25 = sbr.rel (%p23) target = $region8
    $region5: #{tpu_custom_call.1} parent=1 // loop_body
      %s27 = ssub.s32 %s22, 1
      %s28 = ssub.s32 %s22, 2
      %s35 = sadd.s32 1, %s30
      %p36 = scmp.ge.s32.totalorder %s35, 1
      %s37 = scalar_select %p36, 0, %s35
      %s38 = sadd.s32 1, %s29
      %s39 = scalar_select %p36, %s38, %s29
      %p40 = scmp.ge.s32.totalorder %s39, 2
      %s41 = scalar_select %p40, 0, %s39
      %s42 = ssub.s32 %s29, %s41
      %s43 = ssub.s32 %s30, %s37
      %s44 = sor.u32 %s42, %s43
      %p45 = scmp.eq.s32.totalorder %s44, 0
      %s47 = sadd.s32 %s46, 1
      %s48 = scalar_select %p45, %s46, %s47
      %p51 = pneg %p45
      %p52 = scmp.eq.s32.totalorder %s22, 1
      %p53 = por %p51, %p52
      %p54 = scmp.ne.s32.totalorder %s46, %s49
      %p55 = scmp.eq.s32.totalorder %s22, 0
      %p56 = por %p54, %p55
      %p57 = scmp.ne.s32.totalorder %s46, %s49
      %p58 = scmp.eq.s32.totalorder %s27, 1
      %p59 = por %p57, %p58
      %p60 = scmp.ne.s32.totalorder %s49, %s50
      %p61 = scmp.eq.s32.totalorder %s27, 0
      %p62 = por %p60, %p61
      %p63 = scmp.ne.s32.totalorder %s49, %s50
      %p64 = scmp.eq.s32.totalorder %s28, 1
      %p65 = por %p63, %p64
      %p67 = scmp.ne.s32.totalorder %s50, %s66
      %p68 = scmp.eq.s32.totalorder %s28, 0
      %p69 = por %p67, %p68
      %s70 = ssub.s32 %s29, %s41
      %s71 = ssub.s32 %s30, %s37
      %s72 = sor.u32 %s70, %s71
      %p73 = scmp.eq.s32.totalorder %s72, 0
      %s75 = sadd.s32 %s74, 1
      %s76 = scalar_select %p73, %s74, %s75
      %p79 = pneg %p73
      %p80 = scmp.eq.s32.totalorder %s22, 1
      %p81 = por %p79, %p80
      %p82 = scmp.ne.s32.totalorder %s74, %s77
      %p83 = scmp.eq.s32.totalorder %s22, 0
      %p84 = por %p82, %p83
      %p85 = scmp.ne.s32.totalorder %s74, %s77
      %p86 = scmp.eq.s32.totalorder %s27, 1
      %p87 = por %p85, %p86
      %p88 = scmp.ne.s32.totalorder %s77, %s78
      %p89 = scmp.eq.s32.totalorder %s27, 0
      %p90 = por %p88, %p89
      %p91 = scmp.ne.s32.totalorder %s77, %s78
      %p92 = scmp.eq.s32.totalorder %s28, 1
      %p93 = por %p91, %p92
      %p95 = scmp.ne.s32.totalorder %s78, %s94
      %p96 = scmp.eq.s32.totalorder %s28, 0
      %p97 = por %p95, %p96
      %p98 = scmp.le.s32.totalorder 1, %s22
      %p99 = scmp.lt.s32.totalorder %s22, 3
      %p100 = pnand %p98, %p99
      %p101 = pneg %p100
      // Predicated region
      $region9: #{tpu_custom_call.1} parent=5 // pred_check
        _
      $region10: #{tpu_custom_call.1} parent=5 // pred_check_branch
        %103 = sbr.rel (%p100) target = $region12
      $region11: #{tpu_custom_call.1} parent=5 // pred_region
        %s104 = ssub.s32 %s22, 1
      $region12: #{tpu_custom_call.1} parent=5 // pred_fallthru
        _
      %p105 = scmp.lt.s32.totalorder %s22, 2
      // Predicated region
      $region13: #{tpu_custom_call.1} parent=5 // pred_check
        %p106 = pneg %p105
      $region14: #{tpu_custom_call.1} parent=5 // pred_check_branch
        %108 = sbr.rel (%p106) target = $region16
      $region15: #{tpu_custom_call.1} parent=5 // pred_region
        // Predicated region
        $region17: #{tpu_custom_call.1} parent=15 // pred_check
          %p109 = pneg %p56
        $region18: #{tpu_custom_call.1} parent=15 // pred_check_branch
          %111 = sbr.rel (%p109) target = $region20
        $region19: #{tpu_custom_call.1} parent=15 // pred_region
          %s112 = sand.u32 %s46, 1
          %s113 = scalar_lea.sflag [#allocation5], %s112
          %s114 = sand.u32 %s46, 1
          %s115 = smul.addr %s114, 2
          %s116 = scalar_lea.vmem [#allocation4], %s115
          %118 = vsyncadd %s113, 0
          %s119 = sadd.s32 %s30, %s29
          %s120 = smul.addr %s119, 2
          %s121 = scalar_lea.hbm %s1, %s120
          %s123 = sshll.u32 %s121, 4
          %s124 = int_to_ptr.hbm [resolvable:$true] %s123
          %s125 = sshll.u32 %s116, 4
          %s126 = int_to_ptr.vmem [resolvable:$true] %s125
          %128 = dma.hbm_to_vmem [thread:$0]  %s124, 32, %s126, %s113
        $region20: #{tpu_custom_call.1} parent=15 // pred_fallthru
          _
      $region16: #{tpu_custom_call.1} parent=5 // pred_fallthru
        _
      %p129 = scmp.le.s32.totalorder 1, %s22
      %p130 = scmp.lt.s32.totalorder %s22, 3
      %p131 = pnand %p129, %p130
      %p132 = pneg %p131
      // Predicated region
      $region21: #{tpu_custom_call.1} parent=5 // pred_check
        _
      $region22: #{tpu_custom_call.1} parent=5 // pred_check_branch
        %134 = sbr.rel (%p131) target = $region24
      $region23: #{tpu_custom_call.1} parent=5 // pred_region
        %s135 = ssub.s32 %s22, 1
        %s136 = sand.u32 %s49, 1
        %s137 = scalar_lea.sflag [#allocation5], %s136
        %s138 = sand.u32 %s49, 1
        %s139 = smul.addr %s138, 2
        %s140 = scalar_lea.vmem [#allocation4], %s139
        // Predicated region
        $region25: #{tpu_custom_call.1} parent=23 // pred_check
          %p141 = pneg %p62
        $region26: #{tpu_custom_call.1} parent=23 // pred_check_branch
          %143 = sbr.rel (%p141) target = $region28
        $region27: #{tpu_custom_call.1} parent=23 // pred_region
          %145 = dma.done %s137, 32
        $region28: #{tpu_custom_call.1} parent=23 // pred_fallthru
          _
        %s146 = sand.u32 %s49, 1
        %s147 = scalar_lea.sflag [#allocation5], %s146
        %s148 = sand.u32 %s49, 1
        %s149 = smul.addr %s148, 2
        %s150 = scalar_lea.vmem [#allocation4], %s149
        %p151 = pneg %p62
        %p152 = pneg %p59
        %p153 = pneg %p90
        %p154 = pneg %p87
        %s155 = sand.u32 %s77, 1
        %s156 = scalar_lea.sflag [#allocation6], %s155
        %s157 = sand.u32 %s77, 1
        %s158 = smul.addr %s157, 2
        %s159 = scalar_lea.vmem [#allocation7], %s158
        %s160 = sld [smem:[#allocation3 + %s31]]
        %s161 = scvt.s32.f32 %s160
        %s162 = smul.f32 %s161, 2.0
        %v163 = vld [vmem:[%s140] sm:$0x3]
        %v164 = vstv %s162
        %v165 = vmul.f32 %v163, %v164
        %166 = vst [vmem:[%s159] sm:$0x3] %v165
        %s167 = sand.u32 %s77, 1
        %s168 = scalar_lea.sflag [#allocation6], %s167
        %s169 = sand.u32 %s77, 1
        %s170 = smul.addr %s169, 2
        %s171 = scalar_lea.vmem [#allocation7], %s170
        // Predicated region
        $region29: #{tpu_custom_call.1} parent=23 // pred_check
          %p172 = pneg %p87
        $region30: #{tpu_custom_call.1} parent=23 // pred_check_branch
          %174 = sbr.rel (%p172) target = $region32
        $region31: #{tpu_custom_call.1} parent=23 // pred_region
          %176 = vsyncadd %s168, 0
          %s177 = sadd.s32 %s32, %s31
          %s178 = smul.addr %s177, 2
          %s179 = scalar_lea.hbm %s2, %s178
          %s181 = sshll.u32 %s171, 4
          %s182 = int_to_ptr.vmem [resolvable:$true] %s181
          %s183 = sshll.u32 %s179, 4
          %s184 = int_to_ptr.hbm [resolvable:$true] %s183
          %186 = dma.vmem_to_hbm [thread:$0]  %s182, 32, %s184, %s168
        $region32: #{tpu_custom_call.1} parent=23 // pred_fallthru
          _
      $region24: #{tpu_custom_call.1} parent=5 // pred_fallthru
        _
      %p187 = scmp.le.s32.totalorder 2, %s22
      // Predicated region
      $region33: #{tpu_custom_call.1} parent=5 // pred_check
        %p188 = pneg %p187
      $region34: #{tpu_custom_call.1} parent=5 // pred_check_branch
        %190 = sbr.rel (%p188) target = $region36
      $region35: #{tpu_custom_call.1} parent=5 // pred_region
        %s191 = ssub.s32 %s22, 2
        // Predicated region
        $region37: #{tpu_custom_call.1} parent=35 // pred_check
          %p192 = pneg %p93
        $region38: #{tpu_custom_call.1} parent=35 // pred_check_branch
          %194 = sbr.rel (%p192) target = $region40
        $region39: #{tpu_custom_call.1} parent=35 // pred_region
          %s195 = sand.u32 %s78, 1
          %s196 = scalar_lea.sflag [#allocation6], %s195
          %s197 = sand.u32 %s78, 1
          %s198 = smul.addr %s197, 2
          %s199 = scalar_lea.vmem [#allocation7], %s198
          %201 = dma.done %s196, 32
        $region40: #{tpu_custom_call.1} parent=35 // pred_fallthru
          _
      $region36: #{tpu_custom_call.1} parent=5 // pred_fallthru
        _
    $region6: #{tpu_custom_call.1} parent=1 // loop_footer
      %s26 = sadd.s32 1, %s22
    $region7: #{tpu_custom_call.1} parent=1 // loop_footer_branch
      %21 = sbr.rel target = $region3
    $region8: #{tpu_custom_call.1} parent=1 // loop_exit
      _
    %202 = vsyncpa [#allocation5], 1
    %s203 = scalar_lea.sflag [#allocation5], 1
    %204 = vsyncpa %s203, 1
    %205 = vsyncpa [#allocation6], 1
    %s206 = scalar_lea.sflag [#allocation6], 1
    %207 = vsyncpa %s206, 1

</llo_original>
